<compile_context>
chip_gen: v7x
topology: tpu7x:2x2x1
jax: 0.10.0
libtpu: 0.0.40
codegen_flags: <defaults>
</compile_context>

<pallas_src>
import functools

import jax
import jax.numpy as jnp
from jax.experimental import pallas as pl
from jax.experimental.pallas import tpu as pltpu

_GROUP = 8  # batch rows packed per VMEM/HBM row (lane-dense packing factor)


def _round_up(x: int, m: int) -> int:
    return ((x + m - 1) // m) * m


def _block_diag(w: jax.Array, g: int) -> jax.Array:
    """(f, n) -> (g*f, g*n) block-diagonal matrix with g copies of w on the diagonal."""
    f, n = w.shape
    eye = jnp.eye(g, dtype=w.dtype)
    return (eye[:, None, :, None] * w[None, :, None, :]).reshape(g * f, g * n)


def prepare_params(params, ds: int, da: int, dns: int, group: int = _GROUP):
    """One-time repack of the MLP parameters for the packed-batch kernel.

    Splits W1's rows by input group (matching concat order [state, action,
    next_state, done]) and expands every weight matrix into a tiny block-diagonal
    form so the kernel can operate directly on (B/group, group*feat) packed inputs.
    Call this once per parameter set, outside the hot path.
    """
    w1, b1, w2, b2, w3, b3 = params
    assert w1.shape[0] == ds + da + dns + 1, (w1.shape, ds, da, dns)
    w1s, w1a = w1[:ds], w1[ds:ds + da]
    w1ns, w1d = w1[ds + da:ds + da + dns], w1[ds + da + dns:]
    tile_bias = lambda b: jnp.tile(jnp.asarray(b).reshape(1, -1), (1, group))
    return (
        _block_diag(w1s, group), _block_diag(w1a, group),
        _block_diag(w1ns, group), _block_diag(w1d, group), tile_bias(b1),
        _block_diag(w2, group), tile_bias(b2),
        _block_diag(w3, group), tile_bias(b3),
    )


def _mlp_kernel(s_ref, a_ref, ns_ref, d_ref,
                w1s_ref, w1a_ref, w1ns_ref, w1d_ref, b1_ref,
                w2_ref, b2_ref, w3_ref, b3_ref, o_ref):
    f32 = jnp.float32
    # Layer 1: fused "concat @ W1" as a sum of per-input-group block-diagonal matmuls,
    # entirely in the packed (rows, group*feat) domain -> no relayout needed.
    h1 = (jnp.dot(s_ref[...], w1s_ref[...], preferred_element_type=f32)
          + jnp.dot(ns_ref[...], w1ns_ref[...], preferred_element_type=f32)
          + jnp.dot(a_ref[...], w1a_ref[...], preferred_element_type=f32)
          + jnp.dot(d_ref[...], w1d_ref[...], preferred_element_type=f32)
          + b1_ref[...])
    h1 = jnp.maximum(h1, 0.0)                                            # ReLU

    h2 = jnp.dot(h1, w2_ref[...], preferred_element_type=f32) + b2_ref[...]
    h2 = jnp.maximum(h2, 0.0)                                            # ReLU

    out = jnp.dot(h2, w3_ref[...], preferred_element_type=f32) + b3_ref[...]
    o_ref[...] = out.astype(o_ref.dtype)                                 # (rows, group)


def _keep_or_f32(x):
    if x.dtype == jnp.float32 or x.dtype == jnp.bfloat16:
        return x
    return x.astype(jnp.float32)


@functools.partial(jax.jit, static_argnames=("tile_b",))
def basic_reward_mlp_forward(state, action, next_state, done, packed_params,
                             tile_b: int = 8192):
    """Pallas-backed forward of BasicRewardMLP (all use_* flags True).

    `packed_params` must come from `prepare_params`.  Returns shape (B,) float32.
    """
    (w1s, w1a, w1ns, w1d, b1, w2, b2, w3, b3) = packed_params
    G = w1d.shape[0]                       # packing group (8)
    ds, da, dns = w1s.shape[0] // G, w1a.shape[0] // G, w1ns.shape[0] // G

    B = state.shape[0]
    s = _keep_or_f32(state.reshape(B, -1))
    a = _keep_or_f32(action.reshape(B, -1))
    ns = _keep_or_f32(next_state.reshape(B, -1))
    d = _keep_or_f32(done.reshape(B, 1))
    assert s.shape[1] == ds and a.shape[1] == da and ns.shape[1] == dns

    # Pad only to a multiple of the packing group (<= G-1 rows, only when ragged).
    # Rows are independent; padded rows are discarded after the kernel.
    Bp = _round_up(B, G)
    if Bp != B:
        pad = ((0, Bp - B), (0, 0))
        s, a, ns, d = (jnp.pad(v, pad) for v in (s, a, ns, d))

    # Lane-dense packing: (Bp, f) -> (Bp/G, G*f).  Contiguous reshape -> free.
    s = s.reshape(Bp // G, G * ds)
    a = a.reshape(Bp // G, G * da)
    ns = ns.reshape(Bp // G, G * dns)
    d = d.reshape(Bp // G, G)

    # Batch tile: multiple of 128 rows (covers the f32 and bf16 sublane rules for the
    # packed blocks); a small batch becomes one full-array block (exempt from tiling
    # constraints).  No padding to a tile multiple: the last block is clipped by Pallas.
    tile_b = max(128, _round_up(int(tile_b), 128))
    if Bp <= tile_b:
        tile_b = Bp
    rows = tile_b // G
    num_tiles = pl.cdiv(Bp, tile_b)

    bspec = lambda width: pl.BlockSpec((rows, width), lambda i: (i, 0))
    cspec = lambda arr: pl.BlockSpec(arr.shape, lambda i: (0, 0))  # VMEM-resident weights

    out = pl.pallas_call(
        _mlp_kernel,
        out_shape=jax.ShapeDtypeStruct((num_tiles * rows, G), jnp.float32),
        grid=(num_tiles,),
        in_specs=[
            bspec(G * ds), bspec(G * da), bspec(G * dns), bspec(G),
            cspec(w1s), cspec(w1a), cspec(w1ns), cspec(w1d), cspec(b1),
            cspec(w2), cspec(b2), cspec(w3), cspec(b3),
        ],
        out_specs=pl.BlockSpec((rows, G), lambda i: (i, 0)),
        compiler_params=pltpu.CompilerParams(
            dimension_semantics=("parallel",),        # shard batch tiles across TCs (v7x)
            vmem_limit_bytes=32 * 1024 * 1024,        # headroom for tile_b up to ~32K
        ),
    )(s, a, ns, d, w1s, w1a, w1ns, w1d, b1, w2, b2, w3, b3)

    # Packed (rows*num_tiles, G) -> flat batch order; drop padded / clipped rows.
    return out.reshape(-1)[:B]                        # squeeze_output=True -> (B,)


def init_params(key, in_size, hid_sizes=(32, 32), out_size=1):
    """Deterministic synthetic init (PyTorch-Linear-style uniform fan-in bounds)."""
    sizes = (in_size,) + tuple(hid_sizes) + (out_size,)
    params = []
    for i in range(len(sizes) - 1):
        fan_in, fan_out = sizes[i], sizes[i + 1]
        key, kw, kb = jax.random.split(key, 3)
        bound = 1.0 / jnp.sqrt(float(fan_in))
        w = jax.random.uniform(kw, (fan_in, fan_out), jnp.float32, -bound, bound)
        b = jax.random.uniform(kb, (1, fan_out), jnp.float32, -bound, bound)
        params += [w, b]
    return tuple(params)


def reference_forward(state, action, next_state, done, params):
    B = state.shape[0]
    x = jnp.concatenate(
        [state.reshape(B, -1), action.reshape(B, -1),
         next_state.reshape(B, -1), done.reshape(B, 1)], axis=1
    ).astype(jnp.float32)
    w1, b1, w2, b2, w3, b3 = params
    h = jnp.maximum(x @ w1 + b1, 0.0)
    h = jnp.maximum(h @ w2 + b2, 0.0)
    return (h @ w3 + b3)[:, 0]


if __name__ == "__main__":
    key = jax.random.PRNGKey(0)

    OBS_DIM, ACT_DIM = 16, 4          # obs space = Box(16,), action space = Box(4,)
    in_size = OBS_DIM + ACT_DIM + OBS_DIM + 1
    k_p, k_data = jax.random.split(key)
    params = init_params(k_p, in_size)
    packed = prepare_params(params, OBS_DIM, ACT_DIM, OBS_DIM)

    def make_inputs(k, B):
        ks, ka, kns, kd = jax.random.split(k, 4)
        state = jax.random.normal(ks, (B, OBS_DIM), jnp.float32)
        action = jax.random.normal(ka, (B, ACT_DIM), jnp.float32)
        next_state = jax.random.normal(kns, (B, OBS_DIM), jnp.float32)
        done = (jax.random.uniform(kd, (B,)) > 0.5).astype(jnp.float32)
        return state, action, next_state, done

    # 1) Small aligned batch (single full-array block).
    k_data, k1 = jax.random.split(k_data)
    s, a, ns, d = make_inputs(k1, 8)
    out = jax.block_until_ready(basic_reward_mlp_forward(s, a, ns, d, packed))
    ref = reference_forward(s, a, ns, d, params)
    assert out.shape == s.shape[:1], (out.shape, s.shape[:1])
    assert jnp.allclose(out, ref, atol=1e-5, rtol=1e-5), (out, ref)

    # 2) Ragged batch (B % 8 != 0): exercises the small pad-to-group path.
    k_data, k2 = jax.random.split(k_data)
    s2, a2, ns2, d2 = make_inputs(k2, 37)
    out2 = jax.block_until_ready(
        basic_reward_mlp_forward(s2, a2, ns2, d2, packed, tile_b=128))
    ref2 = reference_forward(s2, a2, ns2, d2, params)
    assert out2.shape == (37,)
    assert jnp.allclose(out2, ref2, atol=1e-5, rtol=1e-5), (out2, ref2)

    # 3) Multi-tile batch with a clipped (overhanging) last block.
    k_data, k3 = jax.random.split(k_data)
    s3, a3, ns3, d3 = make_inputs(k3, 300)
    out3 = jax.block_until_ready(
        basic_reward_mlp_forward(s3, a3, ns3, d3, packed, tile_b=128))
    ref3 = reference_forward(s3, a3, ns3, d3, params)
    assert out3.shape == (300,)
    assert jnp.allclose(out3, ref3, atol=1e-5, rtol=1e-5), (out3, ref3)

    print("KERNEL_OK")
</pallas_src>

<mosaic_0001>
module attributes {stable_mosaic.version = 11 : i64} {
  func.func @_mlp_kernel(%arg0: i32, %arg1: memref<1x128xf32, #tpu.memory_space<vmem>>, %arg2: memref<1x32xf32, #tpu.memory_space<vmem>>, %arg3: memref<1x128xf32, #tpu.memory_space<vmem>>, %arg4: memref<1x8xf32, #tpu.memory_space<vmem>>, %arg5: memref<128x256xf32, #tpu.memory_space<vmem>>, %arg6: memref<32x256xf32, #tpu.memory_space<vmem>>, %arg7: memref<128x256xf32, #tpu.memory_space<vmem>>, %arg8: memref<8x256xf32, #tpu.memory_space<vmem>>, %arg9: memref<1x256xf32, #tpu.memory_space<vmem>>, %arg10: memref<256x256xf32, #tpu.memory_space<vmem>>, %arg11: memref<1x256xf32, #tpu.memory_space<vmem>>, %arg12: memref<256x8xf32, #tpu.memory_space<vmem>>, %arg13: memref<1x8xf32, #tpu.memory_space<vmem>>, %arg14: memref<1x8xf32, #tpu.memory_space<vmem>>) attributes {dimension_semantics = [#tpu.dimension_semantics<parallel>], iteration_bounds = array<i64: 1>, scalar_prefetch = 0 : i64, scratch_operands = 0 : i64, tpu.core_type = #tpu.core_type<tc>, window_params = [{transform_indices = @transform_0, window_bounds = array<i64: 1, 128>}, {transform_indices = @transform_1, window_bounds = array<i64: 1, 32>}, {transform_indices = @transform_2, window_bounds = array<i64: 1, 128>}, {transform_indices = @transform_3, window_bounds = array<i64: 1, 8>}, {pipeline_mode = #tpu.pipeline_mode<synchronous>, transform_indices = @transform_4, window_bounds = array<i64: 128, 256>}, {pipeline_mode = #tpu.pipeline_mode<synchronous>, transform_indices = @transform_5, window_bounds = array<i64: 32, 256>}, {pipeline_mode = #tpu.pipeline_mode<synchronous>, transform_indices = @transform_6, window_bounds = array<i64: 128, 256>}, {pipeline_mode = #tpu.pipeline_mode<synchronous>, transform_indices = @transform_7, window_bounds = array<i64: 8, 256>}, {pipeline_mode = #tpu.pipeline_mode<synchronous>, transform_indices = @transform_8, window_bounds = array<i64: 1, 256>}, {pipeline_mode = #tpu.pipeline_mode<synchronous>, transform_indices = @transform_9, window_bounds = array<i64: 256, 256>}, {pipeline_mode = #tpu.pipeline_mode<synchronous>, transform_indices = @transform_10, window_bounds = array<i64: 1, 256>}, {pipeline_mode = #tpu.pipeline_mode<synchronous>, transform_indices = @transform_11, window_bounds = array<i64: 256, 8>}, {pipeline_mode = #tpu.pipeline_mode<synchronous>, transform_indices = @transform_12, window_bounds = array<i64: 1, 8>}, {transform_indices = @transform_13, window_bounds = array<i64: 1, 8>}]} {
    %c0 = arith.constant 0 : index
    %c0_0 = arith.constant 0 : index
    %0 = vector.load %arg1[%c0, %c0_0] : memref<1x128xf32, #tpu.memory_space<vmem>>, vector<1x128xf32>
    %c0_1 = arith.constant 0 : index
    %c0_2 = arith.constant 0 : index
    %1 = vector.load %arg5[%c0_1, %c0_2] : memref<128x256xf32, #tpu.memory_space<vmem>>, vector<128x256xf32>
    %cst = arith.constant dense<0.000000e+00> : vector<1x256xf32>
    %2 = tpu.matmul %0, %1, %cst {dimension_numbers = #tpu.dot_dimension_numbers<[1], [0], [0], [1], [0, 0, 1, 1], [], []>} : vector<1x128xf32>, vector<128x256xf32>, vector<1x256xf32> -> vector<1x256xf32>
    %c0_3 = arith.constant 0 : index
    %c0_4 = arith.constant 0 : index
    %3 = vector.load %arg3[%c0_3, %c0_4] : memref<1x128xf32, #tpu.memory_space<vmem>>, vector<1x128xf32>
    %c0_5 = arith.constant 0 : index
    %c0_6 = arith.constant 0 : index
    %4 = vector.load %arg7[%c0_5, %c0_6] : memref<128x256xf32, #tpu.memory_space<vmem>>, vector<128x256xf32>
    %cst_7 = arith.constant dense<0.000000e+00> : vector<1x256xf32>
    %5 = tpu.matmul %3, %4, %cst_7 {dimension_numbers = #tpu.dot_dimension_numbers<[1], [0], [0], [1], [0, 0, 1, 1], [], []>} : vector<1x128xf32>, vector<128x256xf32>, vector<1x256xf32> -> vector<1x256xf32>
    %6 = arith.addf %2, %5 : vector<1x256xf32>
    %c0_8 = arith.constant 0 : index
    %c0_9 = arith.constant 0 : index
    %7 = vector.load %arg2[%c0_8, %c0_9] : memref<1x32xf32, #tpu.memory_space<vmem>>, vector<1x32xf32>
    %c0_10 = arith.constant 0 : index
    %c0_11 = arith.constant 0 : index
    %8 = vector.load %arg6[%c0_10, %c0_11] : memref<32x256xf32, #tpu.memory_space<vmem>>, vector<32x256xf32>
    %cst_12 = arith.constant dense<0.000000e+00> : vector<1x256xf32>
    %9 = tpu.matmul %7, %8, %cst_12 {dimension_numbers = #tpu.dot_dimension_numbers<[1], [0], [0], [1], [0, 0, 1, 1], [], []>} : vector<1x32xf32>, vector<32x256xf32>, vector<1x256xf32> -> vector<1x256xf32>
    %10 = arith.addf %6, %9 : vector<1x256xf32>
    %c0_13 = arith.constant 0 : index
    %c0_14 = arith.constant 0 : index
    %11 = vector.load %arg4[%c0_13, %c0_14] : memref<1x8xf32, #tpu.memory_space<vmem>>, vector<1x8xf32>
    %c0_15 = arith.constant 0 : index
    %c0_16 = arith.constant 0 : index
    %12 = vector.load %arg8[%c0_15, %c0_16] : memref<8x256xf32, #tpu.memory_space<vmem>>, vector<8x256xf32>
    %cst_17 = arith.constant dense<0.000000e+00> : vector<1x256xf32>
    %13 = tpu.matmul %11, %12, %cst_17 {dimension_numbers = #tpu.dot_dimension_numbers<[1], [0], [0], [1], [0, 0, 1, 1], [], []>} : vector<1x8xf32>, vector<8x256xf32>, vector<1x256xf32> -> vector<1x256xf32>
    %14 = arith.addf %10, %13 : vector<1x256xf32>
    %c0_18 = arith.constant 0 : index
    %c0_19 = arith.constant 0 : index
    %15 = vector.load %arg9[%c0_18, %c0_19] : memref<1x256xf32, #tpu.memory_space<vmem>>, vector<1x256xf32>
    %16 = arith.addf %14, %15 : vector<1x256xf32>
    %cst_20 = arith.constant 0.000000e+00 : f32
    %17 = vector.broadcast %cst_20 : f32 to vector<1x256xf32>
    %18 = arith.maximumf %16, %17 : vector<1x256xf32>
    %c0_21 = arith.constant 0 : index
    %c0_22 = arith.constant 0 : index
    %19 = vector.load %arg10[%c0_21, %c0_22] : memref<256x256xf32, #tpu.memory_space<vmem>>, vector<256x256xf32>
    %cst_23 = arith.constant dense<0.000000e+00> : vector<1x256xf32>
    %20 = tpu.matmul %18, %19, %cst_23 {dimension_numbers = #tpu.dot_dimension_numbers<[1], [0], [0], [1], [0, 0, 1, 1], [], []>} : vector<1x256xf32>, vector<256x256xf32>, vector<1x256xf32> -> vector<1x256xf32>
    %c0_24 = arith.constant 0 : index
    %c0_25 = arith.constant 0 : index
    %21 = vector.load %arg11[%c0_24, %c0_25] : memref<1x256xf32, #tpu.memory_space<vmem>>, vector<1x256xf32>
    %22 = arith.addf %20, %21 : vector<1x256xf32>
    %cst_26 = arith.constant 0.000000e+00 : f32
    %23 = vector.broadcast %cst_26 : f32 to vector<1x256xf32>
    %24 = arith.maximumf %22, %23 : vector<1x256xf32>
    %c0_27 = arith.constant 0 : index
    %c0_28 = arith.constant 0 : index
    %25 = vector.load %arg12[%c0_27, %c0_28] : memref<256x8xf32, #tpu.memory_space<vmem>>, vector<256x8xf32>
    %cst_29 = arith.constant dense<0.000000e+00> : vector<1x8xf32>
    %26 = tpu.matmul %24, %25, %cst_29 {dimension_numbers = #tpu.dot_dimension_numbers<[1], [0], [0], [1], [0, 0, 1, 1], [], []>} : vector<1x256xf32>, vector<256x8xf32>, vector<1x8xf32> -> vector<1x8xf32>
    %c0_30 = arith.constant 0 : index
    %c0_31 = arith.constant 0 : index
    %27 = vector.load %arg13[%c0_30, %c0_31] : memref<1x8xf32, #tpu.memory_space<vmem>>, vector<1x8xf32>
    %28 = arith.addf %26, %27 : vector<1x8xf32>
    %c0_32 = arith.constant 0 : index
    %c0_33 = arith.constant 0 : index
    %29 = vector.load %arg14[%c0_32, %c0_33] : memref<1x8xf32, #tpu.memory_space<vmem>>, vector<1x8xf32>
    tpu.vector_store %arg14[%c0_32, %c0_33], %28 {strides = array<i32>} : memref<1x8xf32, #tpu.memory_space<vmem>>, vector<1x8xf32>,
    return
  }
  func.func @transform_0(%arg0: i32) -> (i32, i32) {
    %c0_i32 = arith.constant 0 : i32
    %c0_i32_0 = arith.constant 0 : i32
    return %arg0, %c0_i32 : i32, i32
  }
  func.func @transform_1(%arg0: i32) -> (i32, i32) {
    %c0_i32 = arith.constant 0 : i32
    %c0_i32_0 = arith.constant 0 : i32
    return %arg0, %c0_i32 : i32, i32
  }
  func.func @transform_2(%arg0: i32) -> (i32, i32) {
    %c0_i32 = arith.constant 0 : i32
    %c0_i32_0 = arith.constant 0 : i32
    return %arg0, %c0_i32 : i32, i32
  }
  func.func @transform_3(%arg0: i32) -> (i32, i32) {
    %c0_i32 = arith.constant 0 : i32
    %c0_i32_0 = arith.constant 0 : i32
    return %arg0, %c0_i32 : i32, i32
  }
  func.func @transform_4(%arg0: i32) -> (i32, i32) {
    %c0_i32 = arith.constant 0 : i32
    %c0_i32_0 = arith.constant 0 : i32
    %c0_i32_1 = arith.constant 0 : i32
    return %c0_i32, %c0_i32_0 : i32, i32
  }
  func.func @transform_5(%arg0: i32) -> (i32, i32) {
    %c0_i32 = arith.constant 0 : i32
    %c0_i32_0 = arith.constant 0 : i32
    %c0_i32_1 = arith.constant 0 : i32
    return %c0_i32, %c0_i32_0 : i32, i32
  }
  func.func @transform_6(%arg0: i32) -> (i32, i32) {
    %c0_i32 = arith.constant 0 : i32
    %c0_i32_0 = arith.constant 0 : i32
    %c0_i32_1 = arith.constant 0 : i32
    return %c0_i32, %c0_i32_0 : i32, i32
  }
  func.func @transform_7(%arg0: i32) -> (i32, i32) {
    %c0_i32 = arith.constant 0 : i32
    %c0_i32_0 = arith.constant 0 : i32
    %c0_i32_1 = arith.constant 0 : i32
    return %c0_i32, %c0_i32_0 : i32, i32
  }
  func.func @transform_8(%arg0: i32) -> (i32, i32) {
    %c0_i32 = arith.constant 0 : i32
    %c0_i32_0 = arith.constant 0 : i32
    %c0_i32_1 = arith.constant 0 : i32
    return %c0_i32, %c0_i32_0 : i32, i32
  }
  func.func @transform_9(%arg0: i32) -> (i32, i32) {
    %c0_i32 = arith.constant 0 : i32
    %c0_i32_0 = arith.constant 0 : i32
    %c0_i32_1 = arith.constant 0 : i32
    return %c0_i32, %c0_i32_0 : i32, i32
  }
  func.func @transform_10(%arg0: i32) -> (i32, i32) {
    %c0_i32 = arith.constant 0 : i32
    %c0_i32_0 = arith.constant 0 : i32
    %c0_i32_1 = arith.constant 0 : i32
    return %c0_i32, %c0_i32_0 : i32, i32
  }
  func.func @transform_11(%arg0: i32) -> (i32, i32) {
    %c0_i32 = arith.constant 0 : i32
    %c0_i32_0 = arith.constant 0 : i32
    %c0_i32_1 = arith.constant 0 : i32
    return %c0_i32, %c0_i32_0 : i32, i32
  }
  func.func @transform_12(%arg0: i32) -> (i32, i32) {
    %c0_i32 = arith.constant 0 : i32
    %c0_i32_0 = arith.constant 0 : i32
    %c0_i32_1 = arith.constant 0 : i32
    return %c0_i32, %c0_i32_0 : i32, i32
  }
  func.func @transform_13(%arg0: i32) -> (i32, i32) {
    %c0_i32 = arith.constant 0 : i32
    %c0_i32_0 = arith.constant 0 : i32
    return %arg0, %c0_i32 : i32, i32
  }
}

</mosaic_0001>

<llo_original>
// kernel: basic_reward_mlp_forward.1
$region0: #{basic_reward_mlp_forward.1}
  #allocation0 [shape = 'u32[]', space=smem, size = 0x4, offset = 0x4, fixed_abs, tag = 'smem constant byte address 0x4 - core index']
  #allocation1 [shape = 'u32[144,128]{1,0:T(1,128)}', space=vmem, size = 0x12000, scoped, tag = 'internal scratch']
  %s0 = inlined_call_operand.vmem [shape: f32[1,128], index: 0, kind: input, shape index: {}]
  %s1 = inlined_call_operand.vmem [shape: f32[1,32], index: 1, kind: input, shape index: {}]
  %s2 = inlined_call_operand.vmem [shape: f32[1,128], index: 2, kind: input, shape index: {}]
  %s3 = inlined_call_operand.hbm [shape: f32[1,8], index: 3, kind: input, shape index: {}]
  %s4 = inlined_call_operand.vmem [shape: f32[128,256], index: 4, kind: input, shape index: {}]
  %s5 = inlined_call_operand.vmem [shape: f32[32,256], index: 5, kind: input, shape index: {}]
  %s6 = inlined_call_operand.hbm [shape: f32[128,256], index: 6, kind: input, shape index: {}]
  %s7 = inlined_call_operand.vmem [shape: f32[8,256], index: 7, kind: input, shape index: {}]
  %s8 = inlined_call_operand.hbm [shape: f32[1,256], index: 8, kind: input, shape index: {}]
  %s9 = inlined_call_operand.hbm [shape: f32[256,256], index: 9, kind: input, shape index: {}]
  %s10 = inlined_call_operand.hbm [shape: f32[1,256], index: 10, kind: input, shape index: {}]
  %s11 = inlined_call_operand.vmem [shape: f32[256,8], index: 11, kind: input, shape index: {}]
  %s12 = inlined_call_operand.vmem [shape: f32[1,8], index: 12, kind: input, shape index: {}]
  %s13 = inlined_call_operand.hbm [shape: f32[1,8], index: 13, kind: output, shape index: {}]
  %s14 = sld [smem:[#allocation0]]
  $region82: #{basic_reward_mlp_forward.1} parent=0
    _
  %s16 = ssub.s32 1, %s14
  %s17 = scalar_select 0, %s16, %s14
  $region1: #{basic_reward_mlp_forward.1} parent=0
    #allocation2 [shape = 'u8[512]{0}', space=vmem, size = 0x400, scoped, tag = 'input window, operand 3, single buffered']
    #allocation3 [shape = 's32[1]{0}', space=sflag, size = 0x4, scoped, tag = 'scoped memory for basic_reward_mlp_forward.1']
    #allocation4 [shape = 's32[1]{0}', space=sflag, size = 0x4, scoped, tag = 'scoped memory for basic_reward_mlp_forward.1']
    #allocation5 [shape = 'u8[131072]{0}', space=vmem, size = 0x20000, scoped, tag = 'input window, operand 6, single buffered']
    #allocation6 [shape = 's32[1]{0}', space=sflag, size = 0x4, scoped, tag = 'scoped memory for basic_reward_mlp_forward.1']
    #allocation7 [shape = 'u8[1024]{0}', space=vmem, size = 0x400, scoped, tag = 'input window, operand 8, single buffered']
    #allocation8 [shape = 'u8[262144]{0}', space=vmem, size = 0x40000, scoped, tag = 'input window, operand 9, single buffered']
    #allocation9 [shape = 's32[1]{0}', space=sflag, size = 0x4, scoped, tag = 'scoped memory for basic_reward_mlp_forward.1']
    #allocation10 [shape = 'u8[1024]{0}', space=vmem, size = 0x400, scoped, tag = 'input window, operand 10, single buffered']
    #allocation11 [shape = 'u8[512]{0}', space=vmem, size = 0x400, scoped, tag = 'output window, operand 0, single buffered']
    %18 = vsyncpa [#allocation3], 0
    %19 = vsyncpa [#allocation6], 0
    %20 = vsyncpa [#allocation9], 0
    %21 = vsyncpa [#allocation4], 0
    // Predicated region
    $region2: #{basic_reward_mlp_forward.1} parent=1 // pred_check
      _
    $region3: #{basic_reward_mlp_forward.1} parent=1 // pred_check_branch
      %23 = sbr.rel (0) target = $region5
    $region4: #{basic_reward_mlp_forward.1} parent=1 // pred_region
      _
    $region5: #{basic_reward_mlp_forward.1} parent=1 // pred_fallthru
      _
    // Predicated region
    $region6: #{basic_reward_mlp_forward.1} parent=1 // pred_check
      _
    $region7: #{basic_reward_mlp_forward.1} parent=1 // pred_check_branch
      %25 = sbr.rel (0) target = $region9
    $region8: #{basic_reward_mlp_forward.1} parent=1 // pred_region
      _
    $region9: #{basic_reward_mlp_forward.1} parent=1 // pred_fallthru
      _
    // Predicated region
    $region10: #{basic_reward_mlp_forward.1} parent=1 // pred_check
      _
    $region11: #{basic_reward_mlp_forward.1} parent=1 // pred_check_branch
      %27 = sbr.rel (0) target = $region13
    $region12: #{basic_reward_mlp_forward.1} parent=1 // pred_region
      _
    $region13: #{basic_reward_mlp_forward.1} parent=1 // pred_fallthru
      _
    // Predicated region
    $region14: #{basic_reward_mlp_forward.1} parent=1 // pred_check
      _
    $region15: #{basic_reward_mlp_forward.1} parent=1 // pred_check_branch
      %29 = sbr.rel (0) target = $region17
    $region16: #{basic_reward_mlp_forward.1} parent=1 // pred_region
      %s31 = ssub.s32 16, 16
      %32 = vsyncadd [#allocation3], %s31
      %s34 = sshll.u32 [#allocation2], 4
      %s35 = int_to_ptr.vmem [resolvable:$true] %s34
      %37 = dma.hbm_to_vmem [thread:$0]  %s3, 16, %s35, [#allocation3]
    $region17: #{basic_reward_mlp_forward.1} parent=1 // pred_fallthru
      _
    // Predicated region
    $region18: #{basic_reward_mlp_forward.1} parent=1 // pred_check
      _
    $region19: #{basic_reward_mlp_forward.1} parent=1 // pred_check_branch
      %39 = sbr.rel (0) target = $region21
    $region20: #{basic_reward_mlp_forward.1} parent=1 // pred_region
      _
    $region21: #{basic_reward_mlp_forward.1} parent=1 // pred_fallthru
      _
    // Predicated region
    $region22: #{basic_reward_mlp_forward.1} parent=1 // pred_check
      _
    $region23: #{basic_reward_mlp_forward.1} parent=1 // pred_check_branch
      %41 = sbr.rel (0) target = $region25
    $region24: #{basic_reward_mlp_forward.1} parent=1 // pred_region
      _
    $region25: #{basic_reward_mlp_forward.1} parent=1 // pred_fallthru
      _
    // Predicated region
    $region26: #{basic_reward_mlp_forward.1} parent=1 // pred_check
      _
    $region27: #{basic_reward_mlp_forward.1} parent=1 // pred_check_branch
      %43 = sbr.rel (0) target = $region29
    $region28: #{basic_reward_mlp_forward.1} parent=1 // pred_region
      %s45 = ssub.s32 4096, 4096
      %46 = vsyncadd [#allocation6], %s45
      %s47 = sshll.u32 [#allocation5], 4
      %s48 = int_to_ptr.vmem [resolvable:$true] %s47
      %53 = dma.hbm_to_vmem [thread:$0]  %s6, 4096, %s48, [#allocation6], 256, 256, 16
    $region29: #{basic_reward_mlp_forward.1} parent=1 // pred_fallthru
      _
    // Predicated region
    $region30: #{basic_reward_mlp_forward.1} parent=1 // pred_check
      _
    $region31: #{basic_reward_mlp_forward.1} parent=1 // pred_check_branch
      %55 = sbr.rel (0) target = $region33
    $region32: #{basic_reward_mlp_forward.1} parent=1 // pred_region
      _
    $region33: #{basic_reward_mlp_forward.1} parent=1 // pred_fallthru
      _
    // Predicated region
    $region34: #{basic_reward_mlp_forward.1} parent=1 // pred_check
      _
    $region35: #{basic_reward_mlp_forward.1} parent=1 // pred_check_branch
      %57 = sbr.rel (0) target = $region37
    $region36: #{basic_reward_mlp_forward.1} parent=1 // pred_region
      %s59 = ssub.s32 32, 32
      %60 = vsyncadd [#allocation6], %s59
      %s62 = sshll.u32 [#allocation7], 4
      %s63 = int_to_ptr.vmem [resolvable:$true] %s62
      %65 = dma.hbm_to_vmem [thread:$0]  %s8, 32, %s63, [#allocation6]
    $region37: #{basic_reward_mlp_forward.1} parent=1 // pred_fallthru
      _
    // Predicated region
    $region38: #{basic_reward_mlp_forward.1} parent=1 // pred_check
      _
    $region39: #{basic_reward_mlp_forward.1} parent=1 // pred_check_branch
      %67 = sbr.rel (0) target = $region41
    $region40: #{basic_reward_mlp_forward.1} parent=1 // pred_region
      %s69 = ssub.s32 8192, 8192
      %70 = vsyncadd [#allocation9], %s69
      %s71 = sshll.u32 [#allocation8], 4
      %s72 = int_to_ptr.vmem [resolvable:$true] %s71
      %77 = dma.hbm_to_vmem [thread:$0]  %s9, 8192, %s72, [#allocation9], 256, 256, 16
    $region41: #{basic_reward_mlp_forward.1} parent=1 // pred_fallthru
      _
    // Predicated region
    $region42: #{basic_reward_mlp_forward.1} parent=1 // pred_check
      _
    $region43: #{basic_reward_mlp_forward.1} parent=1 // pred_check_branch
      %79 = sbr.rel (0) target = $region45
    $region44: #{basic_reward_mlp_forward.1} parent=1 // pred_region
      %s81 = ssub.s32 32, 32
      %82 = vsyncadd [#allocation9], %s81
      %s84 = sshll.u32 [#allocation10], 4
      %s85 = int_to_ptr.vmem [resolvable:$true] %s84
      %87 = dma.hbm_to_vmem [thread:$0]  %s10, 32, %s85, [#allocation9]
    $region45: #{basic_reward_mlp_forward.1} parent=1 // pred_fallthru
      _
    // Predicated region
    $region46: #{basic_reward_mlp_forward.1} parent=1 // pred_check
      _
    $region47: #{basic_reward_mlp_forward.1} parent=1 // pred_check_branch
      %89 = sbr.rel (0) target = $region49
    $region48: #{basic_reward_mlp_forward.1} parent=1 // pred_region
      _
    $region49: #{basic_reward_mlp_forward.1} parent=1 // pred_fallthru
      _
    // Predicated region
    $region50: #{basic_reward_mlp_forward.1} parent=1 // pred_check
      _
    $region51: #{basic_reward_mlp_forward.1} parent=1 // pred_check_branch
      %91 = sbr.rel (0) target = $region53
    $region52: #{basic_reward_mlp_forward.1} parent=1 // pred_region
      _
    $region53: #{basic_reward_mlp_forward.1} parent=1 // pred_fallthru
      _
    // Predicated region
    $region54: #{basic_reward_mlp_forward.1} parent=1 // pred_check
      _
    $region55: #{basic_reward_mlp_forward.1} parent=1 // pred_check_branch
      %93 = sbr.rel (0) target = $region57
    $region56: #{basic_reward_mlp_forward.1} parent=1 // pred_region
      %94 = dma.done [#allocation3], 16
    $region57: #{basic_reward_mlp_forward.1} parent=1 // pred_fallthru
      _
    // Predicated region
    $region58: #{basic_reward_mlp_forward.1} parent=1 // pred_check
      _
    $region59: #{basic_reward_mlp_forward.1} parent=1 // pred_check_branch
      %96 = sbr.rel (0) target = $region61
    $region60: #{basic_reward_mlp_forward.1} parent=1 // pred_region
      %97 = dma.done [#allocation6], 4096
    $region61: #{basic_reward_mlp_forward.1} parent=1 // pred_fallthru
      _
    // Predicated region
    $region62: #{basic_reward_mlp_forward.1} parent=1 // pred_check
      _
    $region63: #{basic_reward_mlp_forward.1} parent=1 // pred_check_branch
      %99 = sbr.rel (0) target = $region65
    $region64: #{basic_reward_mlp_forward.1} parent=1 // pred_region
      %100 = dma.done [#allocation6], 32
    $region65: #{basic_reward_mlp_forward.1} parent=1 // pred_fallthru
      _
    // Predicated region
    $region66: #{basic_reward_mlp_forward.1} parent=1 // pred_check
      _
    $region67: #{basic_reward_mlp_forward.1} parent=1 // pred_check_branch
      %102 = sbr.rel (0) target = $region69
    $region68: #{basic_reward_mlp_forward.1} parent=1 // pred_region
      %103 = dma.done [#allocation9], 8192
    $region69: #{basic_reward_mlp_forward.1} parent=1 // pred_fallthru
      _
    // Predicated region
    $region70: #{basic_reward_mlp_forward.1} parent=1 // pred_check
      _
    $region71: #{basic_reward_mlp_forward.1} parent=1 // pred_check_branch
      %105 = sbr.rel (0) target = $region73
    $region72: #{basic_reward_mlp_forward.1} parent=1 // pred_region
      %106 = dma.done [#allocation9], 32
    $region73: #{basic_reward_mlp_forward.1} parent=1 // pred_fallthru
      _
    %v107 = vld [vmem:[%s0] sm:$0x1]
    %v108 = vld [vmem:[%s4] sm:$0xff]
    %v109 = vld [vmem:[%s4 + $0x8] sm:$0xff]
    %v110 = vld [vmem:[%s4 + $0x10] sm:$0xff]
    %v111 = vld [vmem:[%s4 + $0x18] sm:$0xff]
    %v112 = vld [vmem:[%s4 + $0x20] sm:$0xff]
    %v113 = vld [vmem:[%s4 + $0x28] sm:$0xff]
    %v114 = vld [vmem:[%s4 + $0x30] sm:$0xff]
    %v115 = vld [vmem:[%s4 + $0x38] sm:$0xff]
    %v116 = vld [vmem:[%s4 + $0x40] sm:$0xff]
    %v117 = vld [vmem:[%s4 + $0x48] sm:$0xff]
    %v118 = vld [vmem:[%s4 + $0x50] sm:$0xff]
    %v119 = vld [vmem:[%s4 + $0x58] sm:$0xff]
    %v120 = vld [vmem:[%s4 + $0x60] sm:$0xff]
    %v121 = vld [vmem:[%s4 + $0x68] sm:$0xff]
    %v122 = vld [vmem:[%s4 + $0x70] sm:$0xff]
    %v123 = vld [vmem:[%s4 + $0x78] sm:$0xff]
    %v124 = vld [vmem:[%s4 + $0x80] sm:$0xff]
    %v125 = vld [vmem:[%s4 + $0x88] sm:$0xff]
    %v126 = vld [vmem:[%s4 + $0x90] sm:$0xff]
    %v127 = vld [vmem:[%s4 + $0x98] sm:$0xff]
    %v128 = vld [vmem:[%s4 + $0xa0] sm:$0xff]
    %v129 = vld [vmem:[%s4 + $0xa8] sm:$0xff]
    %v130 = vld [vmem:[%s4 + $0xb0] sm:$0xff]
    %v131 = vld [vmem:[%s4 + $0xb8] sm:$0xff]
    %v132 = vld [vmem:[%s4 + $0xc0] sm:$0xff]
    %v133 = vld [vmem:[%s4 + $0xc8] sm:$0xff]
    %v134 = vld [vmem:[%s4 + $0xd0] sm:$0xff]
    %v135 = vld [vmem:[%s4 + $0xd8] sm:$0xff]
    %v136 = vld [vmem:[%s4 + $0xe0] sm:$0xff]
    %v137 = vld [vmem:[%s4 + $0xe8] sm:$0xff]
    %v138 = vld [vmem:[%s4 + $0xf0] sm:$0xff]
    %v139 = vld [vmem:[%s4 + $0xf8] sm:$0xff]
    %v140 = vld [vmem:[%s2] sm:$0x1]
    %v141 = vld [vmem:[#allocation5] sm:$0xff]
    %v142 = vld [vmem:[#allocation5 + $0x8] sm:$0xff]
    %v143 = vld [vmem:[#allocation5 + $0x10] sm:$0xff]
    %v144 = vld [vmem:[#allocation5 + $0x18] sm:$0xff]
    %v145 = vld [vmem:[#allocation5 + $0x20] sm:$0xff]
    %v146 = vld [vmem:[#allocation5 + $0x28] sm:$0xff]
    %v147 = vld [vmem:[#allocation5 + $0x30] sm:$0xff]
    %v148 = vld [vmem:[#allocation5 + $0x38] sm:$0xff]
    %v149 = vld [vmem:[#allocation5 + $0x40] sm:$0xff]
    %v150 = vld [vmem:[#allocation5 + $0x48] sm:$0xff]
    %v151 = vld [vmem:[#allocation5 + $0x50] sm:$0xff]
    %v152 = vld [vmem:[#allocation5 + $0x58] sm:$0xff]
    %v153 = vld [vmem:[#allocation5 + $0x60] sm:$0xff]
    %v154 = vld [vmem:[#allocation5 + $0x68] sm:$0xff]
    %v155 = vld [vmem:[#allocation5 + $0x70] sm:$0xff]
    %v156 = vld [vmem:[#allocation5 + $0x78] sm:$0xff]
    %v157 = vld [vmem:[#allocation5 + $0x80] sm:$0xff]
    %v158 = vld [vmem:[#allocation5 + $0x88] sm:$0xff]
    %v159 = vld [vmem:[#allocation5 + $0x90] sm:$0xff]
    %v160 = vld [vmem:[#allocation5 + $0x98] sm:$0xff]
    %v161 = vld [vmem:[#allocation5 + $0xa0] sm:$0xff]
    %v162 = vld [vmem:[#allocation5 + $0xa8] sm:$0xff]
    %v163 = vld [vmem:[#allocation5 + $0xb0] sm:$0xff]
    %v164 = vld [vmem:[#allocation5 + $0xb8] sm:$0xff]
    %v165 = vld [vmem:[#allocation5 + $0xc0] sm:$0xff]
    %v166 = vld [vmem:[#allocation5 + $0xc8] sm:$0xff]
    %v167 = vld [vmem:[#allocation5 + $0xd0] sm:$0xff]
    %v168 = vld [vmem:[#allocation5 + $0xd8] sm:$0xff]
    %v169 = vld [vmem:[#allocation5 + $0xe0] sm:$0xff]
    %v170 = vld [vmem:[#allocation5 + $0xe8] sm:$0xff]
    %v171 = vld [vmem:[#allocation5 + $0xf0] sm:$0xff]
    %v172 = vld [vmem:[#allocation5 + $0xf8] sm:$0xff]
    %173 = vmatprep.subr.mxu0 %v142
    %174 = vmatpush1.msra.mxu0 %v141
    %175 = vmatprep.subr.mxu0 %v144
    %176 = vmatpush1.msra.mxu0 %v143
    %177 = vmatprep.subr.mxu0 %v146
    %178 = vmatpush1.msra.mxu0 %v145
    %179 = vmatprep.subr.mxu0 %v148
    %180 = vmatpush1.msra.mxu0 %v147
    %181 = vmatprep.subr.mxu0 %v150
    %182 = vmatpush1.msra.mxu0 %v149
    %183 = vmatprep.subr.mxu0 %v152
    %184 = vmatpush1.msra.mxu0 %v151
    %185 = vmatprep.subr.mxu0 %v154
    %186 = vmatpush1.msra.mxu0 %v153
    %187 = vmatprep.subr.mxu0 %v156
    %188 = vmatpush1.msra.mxu0 %v155
    %189 = vmatprep.subr.mxu0 %v158
    %190 = vmatpush1.msra.mxu0 %v157
    %191 = vmatprep.subr.mxu0 %v160
    %192 = vmatpush1.msra.mxu0 %v159
    %193 = vmatprep.subr.mxu0 %v162
    %194 = vmatpush1.msra.mxu0 %v161
    %195 = vmatprep.subr.mxu0 %v164
    %196 = vmatpush1.msra.mxu0 %v163
    %197 = vmatprep.subr.mxu0 %v166
    %198 = vmatpush1.msra.mxu0 %v165
    %199 = vmatprep.subr.mxu0 %v168
    %200 = vmatpush1.msra.mxu0 %v167
    %201 = vmatprep.subr.mxu0 %v170
    %202 = vmatpush1.msra.mxu0 %v169
    %203 = vmatprep.subr.mxu0 %v172
    %204 = vmatpush1.msra.mxu0 %v171
    %205 = vmatprep.subr.mxu0 0.0
    %206 = vmatpush1.msra.mxu0 0.0
    %207 = vmatprep.subr.mxu0 0.0
    %208 = vmatpush1.msra.mxu0 0.0
    %209 = vmatprep.subr.mxu0 0.0
    %210 = vmatpush1.msra.mxu0 0.0
    %211 = vmatprep.subr.mxu0 0.0
    %212 = vmatpush1.msra.mxu0 0.0
    %213 = vmatprep.subr.mxu0 0.0
    %214 = vmatpush1.msra.mxu0 0.0
    %215 = vmatprep.subr.mxu0 0.0
    %216 = vmatpush1.msra.mxu0 0.0
    %217 = vmatprep.subr.mxu0 0.0
    %218 = vmatpush1.msra.mxu0 0.0
    %219 = vmatprep.subr.mxu0 0.0
    %220 = vmatpush1.msra.mxu0 0.0
    %221 = vmatprep.subr.mxu0 0.0
    %222 = vmatpush1.msra.mxu0 0.0
    %223 = vmatprep.subr.mxu0 0.0
    %224 = vmatpush1.msra.mxu0 0.0
    %225 = vmatprep.subr.mxu0 0.0
    %226 = vmatpush1.msra.mxu0 0.0
    %227 = vmatprep.subr.mxu0 0.0
    %228 = vmatpush1.msra.mxu0 0.0
    %229 = vmatprep.subr.mxu0 0.0
    %230 = vmatpush1.msra.mxu0 0.0
    %231 = vmatprep.subr.mxu0 0.0
    %232 = vmatpush1.msra.mxu0 0.0
    %233 = vmatprep.subr.mxu0 0.0
    %234 = vmatpush1.msra.mxu0 0.0
    %235 = vmatprep.subr.mxu0 0.0
    %236 = vmatpush1.msra.mxu0 0.0
    %237 = vmatprep.mubr.f32.mxu0 0.0
    %238 = vmatmul.mubr.f32.gmra.mrb[0].mxu0 %v140
    %v239 = vpop.f32.mrb[0].mxu0
    %v240 = vadd.f32 0.0, %v239
    %v241 = vpop.f32.mrb[0].mxu0
    %v242 = vadd.f32 0.0, %v241
    %243 = vdwg.mxu0
    %244 = vmatprep.subr.mxu0 %v109
    %245 = vmatpush1.msra.mxu0 %v108
    %246 = vmatprep.subr.mxu0 %v111
    %247 = vmatpush1.msra.mxu0 %v110
    %248 = vmatprep.subr.mxu0 %v113
    %249 = vmatpush1.msra.mxu0 %v112
    %250 = vmatprep.subr.mxu0 %v115
    %251 = vmatpush1.msra.mxu0 %v114
    %252 = vmatprep.subr.mxu0 %v117
    %253 = vmatpush1.msra.mxu0 %v116
    %254 = vmatprep.subr.mxu0 %v119
    %255 = vmatpush1.msra.mxu0 %v118
    %256 = vmatprep.subr.mxu0 %v121
    %257 = vmatpush1.msra.mxu0 %v120
    %258 = vmatprep.subr.mxu0 %v123
    %259 = vmatpush1.msra.mxu0 %v122
    %260 = vmatprep.subr.mxu0 %v125
    %261 = vmatpush1.msra.mxu0 %v124
    %262 = vmatprep.subr.mxu0 %v127
    %263 = vmatpush1.msra.mxu0 %v126
    %264 = vmatprep.subr.mxu0 %v129
    %265 = vmatpush1.msra.mxu0 %v128
    %266 = vmatprep.subr.mxu0 %v131
    %267 = vmatpush1.msra.mxu0 %v130
    %268 = vmatprep.subr.mxu0 %v133
    %269 = vmatpush1.msra.mxu0 %v132
    %270 = vmatprep.subr.mxu0 %v135
    %271 = vmatpush1.msra.mxu0 %v134
    %272 = vmatprep.subr.mxu0 %v137
    %273 = vmatpush1.msra.mxu0 %v136
    %274 = vmatprep.subr.mxu0 %v139
    %275 = vmatpush1.msra.mxu0 %v138
    %276 = vmatprep.subr.mxu0 0.0
    %277 = vmatpush1.msra.mxu0 0.0
    %278 = vmatprep.subr.mxu0 0.0
    %279 = vmatpush1.msra.mxu0 0.0
    %280 = vmatprep.subr.mxu0 0.0
    %281 = vmatpush1.msra.mxu0 0.0
    %282 = vmatprep.subr.mxu0 0.0
    %283 = vmatpush1.msra.mxu0 0.0
    %284 = vmatprep.subr.mxu0 0.0
    %285 = vmatpush1.msra.mxu0 0.0
    %286 = vmatprep.subr.mxu0 0.0
    %287 = vmatpush1.msra.mxu0 0.0
    %288 = vmatprep.subr.mxu0 0.0
    %289 = vmatpush1.msra.mxu0 0.0
    %290 = vmatprep.subr.mxu0 0.0
    %291 = vmatpush1.msra.mxu0 0.0
    %292 = vmatprep.subr.mxu0 0.0
    %293 = vmatpush1.msra.mxu0 0.0
    %294 = vmatprep.subr.mxu0 0.0
    %295 = vmatpush1.msra.mxu0 0.0
    %296 = vmatprep.subr.mxu0 0.0
    %297 = vmatpush1.msra.mxu0 0.0
    %298 = vmatprep.subr.mxu0 0.0
    %299 = vmatpush1.msra.mxu0 0.0
    %300 = vmatprep.subr.mxu0 0.0
    %301 = vmatpush1.msra.mxu0 0.0
    %302 = vmatprep.subr.mxu0 0.0
    %303 = vmatpush1.msra.mxu0 0.0
    %304 = vmatprep.subr.mxu0 0.0
    %305 = vmatpush1.msra.mxu0 0.0
    %306 = vmatprep.subr.mxu0 0.0
    %307 = vmatpush1.msra.mxu0 0.0
    %308 = vmatprep.mubr.f32.mxu0 0.0
    %309 = vmatmul.mubr.f32.gmra.mrb[0].mxu0 %v107
    %v310 = vpop.f32.mrb[0].mxu0
    %v311 = vadd.f32 %v240, %v310
    %v312 = vpop.f32.mrb[0].mxu0
    %v313 = vadd.f32 %v242, %v312
    %314 = vdwg.mxu0
    %v315 = vld [vmem:[%s1] sm:$0x1]
    %v316 = vld [vmem:[%s5] sm:$0xff]
    %v317 = vld [vmem:[%s5 + $0x8] sm:$0xff]
    %v318 = vld [vmem:[%s5 + $0x10] sm:$0xff]
    %v319 = vld [vmem:[%s5 + $0x18] sm:$0xff]
    %v320 = vld [vmem:[%s5 + $0x20] sm:$0xff]
    %v321 = vld [vmem:[%s5 + $0x28] sm:$0xff]
    %v322 = vld [vmem:[%s5 + $0x30] sm:$0xff]
    %v323 = vld [vmem:[%s5 + $0x38] sm:$0xff]
    %vm324 = vcmask 261120
    %v326 = vsel %vm324, %v315, 0
    %328 = vmatprep.subr.mxu0 %v317
    %329 = vmatpush1.msra.mxu0 %v316
    %330 = vmatprep.subr.mxu0 %v319
    %331 = vmatpush1.msra.mxu0 %v318
    %332 = vmatprep.subr.mxu0 %v321
    %333 = vmatpush1.msra.mxu0 %v320
    %334 = vmatprep.subr.mxu0 %v323
    %335 = vmatpush1.msra.mxu0 %v322
    %336 = vmatprep.subr.mxu0 0.0
    %337 = vmatpush1.msra.mxu0 0.0
    %338 = vmatprep.subr.mxu0 0.0
    %339 = vmatpush1.msra.mxu0 0.0
    %340 = vmatprep.subr.mxu0 0.0
    %341 = vmatpush1.msra.mxu0 0.0
    %342 = vmatprep.subr.mxu0 0.0
    %343 = vmatpush1.msra.mxu0 0.0
    %344 = vmatprep.subr.mxu0 0.0
    %345 = vmatpush1.msra.mxu0 0.0
    %346 = vmatprep.subr.mxu0 0.0
    %347 = vmatpush1.msra.mxu0 0.0
    %348 = vmatprep.subr.mxu0 0.0
    %349 = vmatpush1.msra.mxu0 0.0
    %350 = vmatprep.subr.mxu0 0.0
    %351 = vmatpush1.msra.mxu0 0.0
    %352 = vmatprep.subr.mxu0 0.0
    %353 = vmatpush1.msra.mxu0 0.0
    %354 = vmatprep.subr.mxu0 0.0
    %355 = vmatpush1.msra.mxu0 0.0
    %356 = vmatprep.subr.mxu0 0.0
    %357 = vmatpush1.msra.mxu0 0.0
    %358 = vmatprep.subr.mxu0 0.0
    %359 = vmatpush1.msra.mxu0 0.0
    %360 = vmatprep.subr.mxu0 0.0
    %361 = vmatpush1.msra.mxu0 0.0
    %362 = vmatprep.subr.mxu0 0.0
    %363 = vmatpush1.msra.mxu0 0.0
    %364 = vmatprep.subr.mxu0 0.0
    %365 = vmatpush1.msra.mxu0 0.0
    %366 = vmatprep.subr.mxu0 0.0
    %367 = vmatpush1.msra.mxu0 0.0
    %368 = vmatprep.subr.mxu0 0.0
    %369 = vmatpush1.msra.mxu0 0.0
    %370 = vmatprep.subr.mxu0 0.0
    %371 = vmatpush1.msra.mxu0 0.0
    %372 = vmatprep.subr.mxu0 0.0
    %373 = vmatpush1.msra.mxu0 0.0
    %374 = vmatprep.subr.mxu0 0.0
    %375 = vmatpush1.msra.mxu0 0.0
    %376 = vmatprep.subr.mxu0 0.0
    %377 = vmatpush1.msra.mxu0 0.0
    %378 = vmatprep.subr.mxu0 0.0
    %379 = vmatpush1.msra.mxu0 0.0
    %380 = vmatprep.subr.mxu0 0.0
    %381 = vmatpush1.msra.mxu0 0.0
    %382 = vmatprep.subr.mxu0 0.0
    %383 = vmatpush1.msra.mxu0 0.0
    %384 = vmatprep.subr.mxu0 0.0
    %385 = vmatpush1.msra.mxu0 0.0
    %386 = vmatprep.subr.mxu0 0.0
    %387 = vmatpush1.msra.mxu0 0.0
    %388 = vmatprep.subr.mxu0 0.0
    %389 = vmatpush1.msra.mxu0 0.0
    %390 = vmatprep.subr.mxu0 0.0
    %391 = vmatpush1.msra.mxu0 0.0
    %392 = vmatprep.mubr.f32.mxu0 0.0
    %393 = vmatmul.mubr.f32.gmra.mrb[0].mxu0 %v326
    %v394 = vpop.f32.mrb[0].mxu0
    %v395 = vadd.f32 0.0, %v394
    %v396 = vpop.f32.mrb[0].mxu0
    %v397 = vadd.f32 0.0, %v396
    %398 = vdwg.mxu0
    %v399 = vadd.f32 %v311, %v395
    %v400 = vadd.f32 %v313, %v397
    %v401 = vld [vmem:[#allocation2] sm:$0x1]
    %v402 = vld [vmem:[%s7] sm:$0xff]
    %v403 = vld [vmem:[%s7 + $0x8] sm:$0xff]
    %vm404 = vcmask 64512
    %v406 = vsel %vm404, %v401, 0
    %408 = vmatprep.subr.mxu0 %v403
    %409 = vmatpush1.msra.mxu0 %v402
    %410 = vmatprep.subr.mxu0 0.0
    %411 = vmatpush1.msra.mxu0 0.0
    %412 = vmatprep.subr.mxu0 0.0
    %413 = vmatpush1.msra.mxu0 0.0
    %414 = vmatprep.subr.mxu0 0.0
    %415 = vmatpush1.msra.mxu0 0.0
    %416 = vmatprep.subr.mxu0 0.0
    %417 = vmatpush1.msra.mxu0 0.0
    %418 = vmatprep.subr.mxu0 0.0
    %419 = vmatpush1.msra.mxu0 0.0
    %420 = vmatprep.subr.mxu0 0.0
    %421 = vmatpush1.msra.mxu0 0.0
    %422 = vmatprep.subr.mxu0 0.0
    %423 = vmatpush1.msra.mxu0 0.0
    %424 = vmatprep.subr.mxu0 0.0
    %425 = vmatpush1.msra.mxu0 0.0
    %426 = vmatprep.subr.mxu0 0.0
    %427 = vmatpush1.msra.mxu0 0.0
    %428 = vmatprep.subr.mxu0 0.0
    %429 = vmatpush1.msra.mxu0 0.0
    %430 = vmatprep.subr.mxu0 0.0
    %431 = vmatpush1.msra.mxu0 0.0
    %432 = vmatprep.subr.mxu0 0.0
    %433 = vmatpush1.msra.mxu0 0.0
    %434 = vmatprep.subr.mxu0 0.0
    %435 = vmatpush1.msra.mxu0 0.0
    %436 = vmatprep.subr.mxu0 0.0
    %437 = vmatpush1.msra.mxu0 0.0
    %438 = vmatprep.subr.mxu0 0.0
    %439 = vmatpush1.msra.mxu0 0.0
    %440 = vmatprep.subr.mxu0 0.0
    %441 = vmatpush1.msra.mxu0 0.0
    %442 = vmatprep.subr.mxu0 0.0
    %443 = vmatpush1.msra.mxu0 0.0
    %444 = vmatprep.subr.mxu0 0.0
    %445 = vmatpush1.msra.mxu0 0.0
    %446 = vmatprep.subr.mxu0 0.0
    %447 = vmatpush1.msra.mxu0 0.0
    %448 = vmatprep.subr.mxu0 0.0
    %449 = vmatpush1.msra.mxu0 0.0
    %450 = vmatprep.subr.mxu0 0.0
    %451 = vmatpush1.msra.mxu0 0.0
    %452 = vmatprep.subr.mxu0 0.0
    %453 = vmatpush1.msra.mxu0 0.0
    %454 = vmatprep.subr.mxu0 0.0
    %455 = vmatpush1.msra.mxu0 0.0
    %456 = vmatprep.subr.mxu0 0.0
    %457 = vmatpush1.msra.mxu0 0.0
    %458 = vmatprep.subr.mxu0 0.0
    %459 = vmatpush1.msra.mxu0 0.0
    %460 = vmatprep.subr.mxu0 0.0
    %461 = vmatpush1.msra.mxu0 0.0
    %462 = vmatprep.subr.mxu0 0.0
    %463 = vmatpush1.msra.mxu0 0.0
    %464 = vmatprep.subr.mxu0 0.0
    %465 = vmatpush1.msra.mxu0 0.0
    %466 = vmatprep.subr.mxu0 0.0
    %467 = vmatpush1.msra.mxu0 0.0
    %468 = vmatprep.subr.mxu0 0.0
    %469 = vmatpush1.msra.mxu0 0.0
    %470 = vmatprep.subr.mxu0 0.0
    %471 = vmatpush1.msra.mxu0 0.0
    %472 = vmatprep.mubr.f32.mxu0 0.0
    %473 = vmatmul.mubr.f32.gmra.mrb[0].mxu0 %v406
    %v474 = vpop.f32.mrb[0].mxu0
    %v475 = vadd.f32 0.0, %v474
    %v476 = vpop.f32.mrb[0].mxu0
    %v477 = vadd.f32 0.0, %v476
    %478 = vdwg.mxu0
    %v479 = vadd.f32 %v399, %v475
    %v480 = vadd.f32 %v400, %v477
    %v481 = vld [vmem:[#allocation7] sm:$0x3]
    %v483 = vlaneseq
    %v484 = vshrl.u32 %v483, 7
    %v485 = vsub.s32 0, %v484
    %v486 = vrot.slane %v481, %v485
    %v487 = vlaneseq
    %v488 = vshrl.u32 %v487, 7
    %v489 = vsub.s32 1, %v488
    %v490 = vrot.slane %v481, %v489
    %v493 = vadd.f32 %v479, %v486
    %v494 = vadd.f32 %v480, %v490
    %v495 = vmax.f32 %v493, 0.0
    %v496 = vmax.f32 %v494, 0.0
    %v497 = vld [vmem:[#allocation8] sm:$0xff]
    %v498 = vld [vmem:[#allocation8 + $0x8] sm:$0xff]
    %v499 = vld [vmem:[#allocation8 + $0x10] sm:$0xff]
    %v500 = vld [vmem:[#allocation8 + $0x18] sm:$0xff]
    %v501 = vld [vmem:[#allocation8 + $0x20] sm:$0xff]
    %v502 = vld [vmem:[#allocation8 + $0x28] sm:$0xff]
    %v503 = vld [vmem:[#allocation8 + $0x30] sm:$0xff]
    %v504 = vld [vmem:[#allocation8 + $0x38] sm:$0xff]
    %v505 = vld [vmem:[#allocation8 + $0x40] sm:$0xff]
    %v506 = vld [vmem:[#allocation8 + $0x48] sm:$0xff]
    %v507 = vld [vmem:[#allocation8 + $0x50] sm:$0xff]
    %v508 = vld [vmem:[#allocation8 + $0x58] sm:$0xff]
    %v509 = vld [vmem:[#allocation8 + $0x60] sm:$0xff]
    %v510 = vld [vmem:[#allocation8 + $0x68] sm:$0xff]
    %v511 = vld [vmem:[#allocation8 + $0x70] sm:$0xff]
    %v512 = vld [vmem:[#allocation8 + $0x78] sm:$0xff]
    %v513 = vld [vmem:[#allocation8 + $0x80] sm:$0xff]
    %v514 = vld [vmem:[#allocation8 + $0x88] sm:$0xff]
    %v515 = vld [vmem:[#allocation8 + $0x90] sm:$0xff]
    %v516 = vld [vmem:[#allocation8 + $0x98] sm:$0xff]
    %v517 = vld [vmem:[#allocation8 + $0xa0] sm:$0xff]
    %v518 = vld [vmem:[#allocation8 + $0xa8] sm:$0xff]
    %v519 = vld [vmem:[#allocation8 + $0xb0] sm:$0xff]
    %v520 = vld [vmem:[#allocation8 + $0xb8] sm:$0xff]
    %v521 = vld [vmem:[#allocation8 + $0xc0] sm:$0xff]
    %v522 = vld [vmem:[#allocation8 + $0xc8] sm:$0xff]
    %v523 = vld [vmem:[#allocation8 + $0xd0] sm:$0xff]
    %v524 = vld [vmem:[#allocation8 + $0xd8] sm:$0xff]
    %v525 = vld [vmem:[#allocation8 + $0xe0] sm:$0xff]
    %v526 = vld [vmem:[#allocation8 + $0xe8] sm:$0xff]
    %v527 = vld [vmem:[#allocation8 + $0xf0] sm:$0xff]
    %v528 = vld [vmem:[#allocation8 + $0xf8] sm:$0xff]
    %v529 = vld [vmem:[#allocation8 + $0x100] sm:$0xff]
    %v530 = vld [vmem:[#allocation8 + $0x108] sm:$0xff]
    %v531 = vld [vmem:[#allocation8 + $0x110] sm:$0xff]
    %v532 = vld [vmem:[#allocation8 + $0x118] sm:$0xff]
    %v533 = vld [vmem:[#allocation8 + $0x120] sm:$0xff]
    %v534 = vld [vmem:[#allocation8 + $0x128] sm:$0xff]
    %v535 = vld [vmem:[#allocation8 + $0x130] sm:$0xff]
    %v536 = vld [vmem:[#allocation8 + $0x138] sm:$0xff]
    %v537 = vld [vmem:[#allocation8 + $0x140] sm:$0xff]
    %v538 = vld [vmem:[#allocation8 + $0x148] sm:$0xff]
    %v539 = vld [vmem:[#allocation8 + $0x150] sm:$0xff]
    %v540 = vld [vmem:[#allocation8 + $0x158] sm:$0xff]
    %v541 = vld [vmem:[#allocation8 + $0x160] sm:$0xff]
    %v542 = vld [vmem:[#allocation8 + $0x168] sm:$0xff]
    %v543 = vld [vmem:[#allocation8 + $0x170] sm:$0xff]
    %v544 = vld [vmem:[#allocation8 + $0x178] sm:$0xff]
    %v545 = vld [vmem:[#allocation8 + $0x180] sm:$0xff]
    %v546 = vld [vmem:[#allocation8 + $0x188] sm:$0xff]
    %v547 = vld [vmem:[#allocation8 + $0x190] sm:$0xff]
    %v548 = vld [vmem:[#allocation8 + $0x198] sm:$0xff]
    %v549 = vld [vmem:[#allocation8 + $0x1a0] sm:$0xff]
    %v550 = vld [vmem:[#allocation8 + $0x1a8] sm:$0xff]
    %v551 = vld [vmem:[#allocation8 + $0x1b0] sm:$0xff]
    %v552 = vld [vmem:[#allocation8 + $0x1b8] sm:$0xff]
    %v553 = vld [vmem:[#allocation8 + $0x1c0] sm:$0xff]
    %v554 = vld [vmem:[#allocation8 + $0x1c8] sm:$0xff]
    %v555 = vld [vmem:[#allocation8 + $0x1d0] sm:$0xff]
    %v556 = vld [vmem:[#allocation8 + $0x1d8] sm:$0xff]
    %v557 = vld [vmem:[#allocation8 + $0x1e0] sm:$0xff]
    %v558 = vld [vmem:[#allocation8 + $0x1e8] sm:$0xff]
    %v559 = vld [vmem:[#allocation8 + $0x1f0] sm:$0xff]
    %v560 = vld [vmem:[#allocation8 + $0x1f8] sm:$0xff]
    %v561 = vld [vmem:[#allocation10] sm:$0x3]
    %v563 = vlaneseq
    %v564 = vshrl.u32 %v563, 7
    %v565 = vsub.s32 0, %v564
    %v566 = vrot.slane %v561, %v565
    %v567 = vlaneseq
    %v568 = vshrl.u32 %v567, 7
    %v569 = vsub.s32 1, %v568
    %v570 = vrot.slane %v561, %v569
    %573 = vmatprep.subr.mxu0 %v498
    %574 = vmatpush1.msra.mxu0 %v497
    %575 = vmatprep.subr.mxu0 %v500
    %576 = vmatpush1.msra.mxu0 %v499
    %577 = vmatprep.subr.mxu0 %v502
    %578 = vmatpush1.msra.mxu0 %v501
    %579 = vmatprep.subr.mxu0 %v504
    %580 = vmatpush1.msra.mxu0 %v503
    %581 = vmatprep.subr.mxu0 %v506
    %582 = vmatpush1.msra.mxu0 %v505
    %583 = vmatprep.subr.mxu0 %v508
    %584 = vmatpush1.msra.mxu0 %v507
    %585 = vmatprep.subr.mxu0 %v510
    %586 = vmatpush1.msra.mxu0 %v509
    %587 = vmatprep.subr.mxu0 %v512
    %588 = vmatpush1.msra.mxu0 %v511
    %589 = vmatprep.subr.mxu0 %v514
    %590 = vmatpush1.msra.mxu0 %v513
    %591 = vmatprep.subr.mxu0 %v516
    %592 = vmatpush1.msra.mxu0 %v515
    %593 = vmatprep.subr.mxu0 %v518
    %594 = vmatpush1.msra.mxu0 %v517
    %595 = vmatprep.subr.mxu0 %v520
    %596 = vmatpush1.msra.mxu0 %v519
    %597 = vmatprep.subr.mxu0 %v522
    %598 = vmatpush1.msra.mxu0 %v521
    %599 = vmatprep.subr.mxu0 %v524
    %600 = vmatpush1.msra.mxu0 %v523
    %601 = vmatprep.subr.mxu0 %v526
    %602 = vmatpush1.msra.mxu0 %v525
    %603 = vmatprep.subr.mxu0 %v528
    %604 = vmatpush1.msra.mxu0 %v527
    %605 = vmatprep.subr.mxu0 %v530
    %606 = vmatpush1.msra.mxu0 %v529
    %607 = vmatprep.subr.mxu0 %v532
    %608 = vmatpush1.msra.mxu0 %v531
    %609 = vmatprep.subr.mxu0 %v534
    %610 = vmatpush1.msra.mxu0 %v533
    %611 = vmatprep.subr.mxu0 %v536
    %612 = vmatpush1.msra.mxu0 %v535
    %613 = vmatprep.subr.mxu0 %v538
    %614 = vmatpush1.msra.mxu0 %v537
    %615 = vmatprep.subr.mxu0 %v540
    %616 = vmatpush1.msra.mxu0 %v539
    %617 = vmatprep.subr.mxu0 %v542
    %618 = vmatpush1.msra.mxu0 %v541
    %619 = vmatprep.subr.mxu0 %v544
    %620 = vmatpush1.msra.mxu0 %v543
    %621 = vmatprep.subr.mxu0 %v546
    %622 = vmatpush1.msra.mxu0 %v545
    %623 = vmatprep.subr.mxu0 %v548
    %624 = vmatpush1.msra.mxu0 %v547
    %625 = vmatprep.subr.mxu0 %v550
    %626 = vmatpush1.msra.mxu0 %v549
    %627 = vmatprep.subr.mxu0 %v552
    %628 = vmatpush1.msra.mxu0 %v551
    %629 = vmatprep.subr.mxu0 %v554
    %630 = vmatpush1.msra.mxu0 %v553
    %631 = vmatprep.subr.mxu0 %v556
    %632 = vmatpush1.msra.mxu0 %v555
    %633 = vmatprep.subr.mxu0 %v558
    %634 = vmatpush1.msra.mxu0 %v557
    %635 = vmatprep.subr.mxu0 %v560
    %636 = vmatpush1.msra.mxu0 %v559
    %637 = vmatprep.mubr.f32.mxu0 %v496
    %638 = vmatmul.mubr.f32.gmra.mrb[0].mxu0 %v495
    %v639 = vpop.f32.mrb[0].mxu0
    %v640 = vadd.f32 %v566, %v639
    %v641 = vpop.f32.mrb[0].mxu0
    %v642 = vadd.f32 %v570, %v641
    %643 = vdwg.mxu0
    %v644 = vmax.f32 %v640, 0.0
    %v645 = vmax.f32 %v642, 0.0
    %v646 = vld [vmem:[%s11] sm:$0xff]
    %v647 = vld [vmem:[%s11 + $0x8] sm:$0xff]
    %v648 = vld [vmem:[%s11 + $0x10] sm:$0xff]
    %v649 = vld [vmem:[%s11 + $0x18] sm:$0xff]
    %v650 = vld [vmem:[%s11 + $0x20] sm:$0xff]
    %v651 = vld [vmem:[%s11 + $0x28] sm:$0xff]
    %v652 = vld [vmem:[%s11 + $0x30] sm:$0xff]
    %v653 = vld [vmem:[%s11 + $0x38] sm:$0xff]
    %v654 = vld [vmem:[%s11 + $0x40] sm:$0xff]
    %v655 = vld [vmem:[%s11 + $0x48] sm:$0xff]
    %v656 = vld [vmem:[%s11 + $0x50] sm:$0xff]
    %v657 = vld [vmem:[%s11 + $0x58] sm:$0xff]
    %v658 = vld [vmem:[%s11 + $0x60] sm:$0xff]
    %v659 = vld [vmem:[%s11 + $0x68] sm:$0xff]
    %v660 = vld [vmem:[%s11 + $0x70] sm:$0xff]
    %v661 = vld [vmem:[%s11 + $0x78] sm:$0xff]
    %v662 = vld [vmem:[%s11 + $0x80] sm:$0xff]
    %v663 = vld [vmem:[%s11 + $0x88] sm:$0xff]
    %v664 = vld [vmem:[%s11 + $0x90] sm:$0xff]
    %v665 = vld [vmem:[%s11 + $0x98] sm:$0xff]
    %v666 = vld [vmem:[%s11 + $0xa0] sm:$0xff]
    %v667 = vld [vmem:[%s11 + $0xa8] sm:$0xff]
    %v668 = vld [vmem:[%s11 + $0xb0] sm:$0xff]
    %v669 = vld [vmem:[%s11 + $0xb8] sm:$0xff]
    %v670 = vld [vmem:[%s11 + $0xc0] sm:$0xff]
    %v671 = vld [vmem:[%s11 + $0xc8] sm:$0xff]
    %v672 = vld [vmem:[%s11 + $0xd0] sm:$0xff]
    %v673 = vld [vmem:[%s11 + $0xd8] sm:$0xff]
    %v674 = vld [vmem:[%s11 + $0xe0] sm:$0xff]
    %v675 = vld [vmem:[%s11 + $0xe8] sm:$0xff]
    %v676 = vld [vmem:[%s11 + $0xf0] sm:$0xff]
    %v677 = vld [vmem:[%s11 + $0xf8] sm:$0xff]
    %v678 = vld [vmem:[%s12] sm:$0x1]
    %679 = vmatprep.subr.mxu0 0.0
    %680 = vmatpush1.msra.mxu0 %v646
    %681 = vmatprep.subr.mxu0 0.0
    %682 = vmatpush1.msra.mxu0 %v647
    %683 = vmatprep.subr.mxu0 0.0
    %684 = vmatpush1.msra.mxu0 %v648
    %685 = vmatprep.subr.mxu0 0.0
    %686 = vmatpush1.msra.mxu0 %v649
    %687 = vmatprep.subr.mxu0 0.0
    %688 = vmatpush1.msra.mxu0 %v650
    %689 = vmatprep.subr.mxu0 0.0
    %690 = vmatpush1.msra.mxu0 %v651
    %691 = vmatprep.subr.mxu0 0.0
    %692 = vmatpush1.msra.mxu0 %v652
    %693 = vmatprep.subr.mxu0 0.0
    %694 = vmatpush1.msra.mxu0 %v653
    %695 = vmatprep.subr.mxu0 0.0
    %696 = vmatpush1.msra.mxu0 %v654
    %697 = vmatprep.subr.mxu0 0.0
    %698 = vmatpush1.msra.mxu0 %v655
    %699 = vmatprep.subr.mxu0 0.0
    %700 = vmatpush1.msra.mxu0 %v656
    %701 = vmatprep.subr.mxu0 0.0
    %702 = vmatpush1.msra.mxu0 %v657
    %703 = vmatprep.subr.mxu0 0.0
    %704 = vmatpush1.msra.mxu0 %v658
    %705 = vmatprep.subr.mxu0 0.0
    %706 = vmatpush1.msra.mxu0 %v659
    %707 = vmatprep.subr.mxu0 0.0
    %708 = vmatpush1.msra.mxu0 %v660
    %709 = vmatprep.subr.mxu0 0.0
    %710 = vmatpush1.msra.mxu0 %v661
    %711 = vmatprep.subr.mxu0 0.0
    %712 = vmatpush1.msra.mxu0 %v662
    %713 = vmatprep.subr.mxu0 0.0
    %714 = vmatpush1.msra.mxu0 %v663
    %715 = vmatprep.subr.mxu0 0.0
    %716 = vmatpush1.msra.mxu0 %v664
    %717 = vmatprep.subr.mxu0 0.0
    %718 = vmatpush1.msra.mxu0 %v665
    %719 = vmatprep.subr.mxu0 0.0
    %720 = vmatpush1.msra.mxu0 %v666
    %721 = vmatprep.subr.mxu0 0.0
    %722 = vmatpush1.msra.mxu0 %v667
    %723 = vmatprep.subr.mxu0 0.0
    %724 = vmatpush1.msra.mxu0 %v668
    %725 = vmatprep.subr.mxu0 0.0
    %726 = vmatpush1.msra.mxu0 %v669
    %727 = vmatprep.subr.mxu0 0.0
    %728 = vmatpush1.msra.mxu0 %v670
    %729 = vmatprep.subr.mxu0 0.0
    %730 = vmatpush1.msra.mxu0 %v671
    %731 = vmatprep.subr.mxu0 0.0
    %732 = vmatpush1.msra.mxu0 %v672
    %733 = vmatprep.subr.mxu0 0.0
    %734 = vmatpush1.msra.mxu0 %v673
    %735 = vmatprep.subr.mxu0 0.0
    %736 = vmatpush1.msra.mxu0 %v674
    %737 = vmatprep.subr.mxu0 0.0
    %738 = vmatpush1.msra.mxu0 %v675
    %739 = vmatprep.subr.mxu0 0.0
    %740 = vmatpush1.msra.mxu0 %v676
    %741 = vmatprep.subr.mxu0 0.0
    %742 = vmatpush1.msra.mxu0 %v677
    %743 = vmatprep.mubr.f32.mxu0 %v645
    %744 = vmatmul.mubr.f32.gmra.mrb[0].mxu0 %v644
    %v745 = vpop.f32.mrb[0].mxu0
    %v746 = vadd.f32 %v678, %v745
    %v747 = vpop.f32.mrb[0].mxu0
    %748 = vdwg.mxu0
    %vm749 = vcmask 57344
    %750 = vst.msk [vmem:[#allocation11] sm:$0x1] %vm749, %v746
    // Predicated region
    $region74: #{basic_reward_mlp_forward.1} parent=1 // pred_check
      _
    $region75: #{basic_reward_mlp_forward.1} parent=1 // pred_check_branch
      %752 = sbr.rel (0) target = $region77
    $region76: #{basic_reward_mlp_forward.1} parent=1 // pred_region
      %s754 = ssub.s32 16, 16
      %755 = vsyncadd [#allocation4], %s754
      %s757 = sshll.u32 [#allocation11], 4
      %s758 = int_to_ptr.vmem [resolvable:$true] %s757
      %760 = dma.vmem_to_hbm [thread:$0]  %s758, 16, %s13, [#allocation4]
    $region77: #{basic_reward_mlp_forward.1} parent=1 // pred_fallthru
      _
    // Predicated region
    $region78: #{basic_reward_mlp_forward.1} parent=1 // pred_check
      _
    $region79: #{basic_reward_mlp_forward.1} parent=1 // pred_check_branch
      %762 = sbr.rel (0) target = $region81
    $region80: #{basic_reward_mlp_forward.1} parent=1 // pred_region
      %763 = dma.done [#allocation4], 16
    $region81: #{basic_reward_mlp_forward.1} parent=1 // pred_fallthru
      _
    %764 = vsyncpa [#allocation3], 1
    %765 = vsyncpa [#allocation6], 1
    %766 = vsyncpa [#allocation9], 1
    %767 = vsyncpa [#allocation4], 1

</llo_original>
